<compile_context>
chip_gen: v5e
topology: v5e:2x2
jax: 0.10.0
libtpu: 0.0.40
codegen_flags: <defaults>
</compile_context>

<pallas_src>
import functools

import jax
import jax.numpy as jnp
from jax.experimental import pallas as pl
from jax.experimental.pallas import tpu as pltpu


_WC = 512          # lane-aligned chunk width for the fp32 partial sums (4 vregs)
_MAX_THW = 16384   # cap on the two-pass spatial tile (<= 32 unrolled chunk adds)


def _round_up(x, m):
    return ((x + m - 1) // m) * m


def _vmem_budget_bytes():
    """Generation-aware usable-VMEM budget (~75% of physical)."""
    cap = None
    try:
        cap = getattr(pltpu.get_tpu_info(), "vmem_capacity_bytes", None)
    except Exception:
        cap = None
    if not cap:
        cap = 64 * 1024 * 1024     # conservative default (v7x physical VMEM)
    return (int(cap) * 3) // 4


def _excite(pooled_col, w1_ref, b1_ref, w2_ref, b2_ref):
    """Conv1x1(C->C/2) -> Hswish -> Conv1x1(C/2->C) -> Sigmoid on a (C, 1) column."""
    h = jnp.dot(w1_ref[...], pooled_col,
                preferred_element_type=jnp.float32) + b1_ref[...]        # (C2, 1)
    h = h * jnp.clip(h + 3.0, 0.0, 6.0) * (1.0 / 6.0)                    # Hswish
    s = jnp.dot(w2_ref[...], h,
                preferred_element_type=jnp.float32) + b2_ref[...]        # (C, 1)
    return jax.nn.sigmoid(s)                                             # (C, 1) fp32


def _chunk_accumulate(x_ref, part, base, *, width, wc, hw, needs_mask):
    """Add `width // wc` lane-aligned, wc-wide chunks of x_ref (shape (C, >=width))
    into the fp32 partial `part` (C, wc).  Global spatial positions >= hw are
    masked out (only relevant for the ragged last grid block)."""
    lane = jax.lax.broadcasted_iota(jnp.int32, (1, wc), 1) if needs_mask else None
    for j in range(width // wc):
        blk = x_ref[:, j * wc:(j + 1) * wc].astype(jnp.float32)
        if needs_mask:
            blk = jnp.where(base + j * wc + lane < hw, blk, 0.0)
        part = part + blk
    return part


# ---------------------------------------------------------------------------
# Fused single-pass kernel: one batch row per grid step, x read exactly once.
# ---------------------------------------------------------------------------
def _fused_kernel(x_ref, w1_ref, b1_ref, w2_ref, b2_ref, o_ref, *, hw, inv_hw):
    # x_ref / o_ref: (C, HW)  (batch dim squeezed; block spans the full extent,
    # so no garbage lanes and no masking is needed).
    c = x_ref.shape[0]
    w_full = (hw // _WC) * _WC
    total = jnp.zeros((c, 1), jnp.float32)
    if w_full > 0:
        part = _chunk_accumulate(x_ref, jnp.zeros((c, _WC), jnp.float32), 0,
                                 width=w_full, wc=_WC, hw=hw, needs_mask=False)
        total = total + jnp.sum(part, axis=1, keepdims=True)
    if hw > w_full:
        # ragged (< 512-wide) tail; its start offset is 128-aligned.
        tail = x_ref[:, w_full:hw].astype(jnp.float32)
        total = total + jnp.sum(tail, axis=1, keepdims=True)
    pooled = total * inv_hw                                              # (C, 1)
    sig = _excite(pooled, w1_ref, b1_ref, w2_ref, b2_ref).astype(o_ref.dtype)
    o_ref[...] = x_ref[...] * sig                                        # lane broadcast


# ---------------------------------------------------------------------------
# Two-pass fallback: pass 1 = pooled mean + excite -> sig, pass 2 = x * sig.
# ---------------------------------------------------------------------------
def _pool_excite_kernel(x_ref, w1_ref, b1_ref, w2_ref, b2_ref, sig_ref, acc_ref,
                        *, hw, thw, wc, inv_hw, needs_mask):
    # x_ref: (C, thw) spatial tile;  acc_ref: (C, wc) fp32 running partial sums.
    k = pl.program_id(1)

    @pl.when(k == 0)
    def _():
        acc_ref[...] = jnp.zeros_like(acc_ref)

    acc_ref[...] = _chunk_accumulate(x_ref, acc_ref[...], k * thw,
                                     width=thw, wc=wc, hw=hw, needs_mask=needs_mask)

    @pl.when(k == pl.num_programs(1) - 1)
    def _():
        pooled = jnp.sum(acc_ref[...], axis=1, keepdims=True) * inv_hw   # (C, 1)
        sig = _excite(pooled, w1_ref, b1_ref, w2_ref, b2_ref)
        sig_ref[...] = sig.astype(sig_ref.dtype)                          # (C, 1)


def _scale_kernel(x_ref, sig_ref, o_ref):
    # x_ref / o_ref: (C, thw);  sig_ref: (C, 1) already in x's dtype.
    o_ref[...] = x_ref[...] * sig_ref[...]


def se_module_forward(x_nchw, w1, b1, w2, b2, *,
                      force_two_pass=False, max_spatial_tile=None):
    """x_nchw: (B, C, H, W). Params: w1 (C//2, C), b1 (C//2,), w2 (C, C//2), b2 (C,)."""
    B, C, H, W = x_nchw.shape
    C2 = w1.shape[0]
    HW = H * W
    x = x_nchw.reshape(B, C, HW)                 # contiguous collapse: free in XLA
    itemsize = jnp.dtype(x.dtype).itemsize

    w1f = w1.astype(jnp.float32)                 # (C2, C)
    b1c = b1.astype(jnp.float32).reshape(C2, 1)
    w2f = w2.astype(jnp.float32)                 # (C, C2)
    b2c = b2.astype(jnp.float32).reshape(C, 1)

    inv_hw = 1.0 / float(HW)
    budget = _vmem_budget_bytes()
    c_pad = _round_up(C, 8)
    hw128 = _round_up(HW, 128)
    param_bytes = 4 * 2 * (2 * C * C2 + C + C2)  # fp32 params, double-buffered
    avail = max(budget - param_bytes - (1 << 20), 1 << 20)

    def cparams(dims):
        return pltpu.CompilerParams(dimension_semantics=dims,
                                    vmem_limit_bytes=budget)

    # ---- fused single-pass: one read + one write of x (2x|x| HBM traffic) ------
    fused_bytes = 4 * c_pad * hw128 * itemsize + c_pad * _WC * 4
    if (not force_two_pass and max_spatial_tile is None
            and fused_bytes <= avail and HW // _WC <= 256):
        out = pl.pallas_call(
            functools.partial(_fused_kernel, hw=HW, inv_hw=inv_hw),
            out_shape=jax.ShapeDtypeStruct((B, C, HW), x.dtype),
            grid_spec=pltpu.PrefetchScalarGridSpec(
                num_scalar_prefetch=0,
                grid=(B,),
                in_specs=[
                    pl.BlockSpec((None, C, HW), lambda b: (b, 0, 0)),
                    pl.BlockSpec((C2, C), lambda b: (0, 0)),
                    pl.BlockSpec((C2, 1), lambda b: (0, 0)),
                    pl.BlockSpec((C, C2), lambda b: (0, 0)),
                    pl.BlockSpec((C, 1), lambda b: (0, 0)),
                ],
                out_specs=pl.BlockSpec((None, C, HW), lambda b: (b, 0, 0)),
            ),
            compiler_params=cparams(("parallel",)),
        )(x, w1f, b1c, w2f, b2c)
        return out.reshape(B, C, H, W)

    # ---- two-pass fallback (per-row image too big for VMEM) --------------------
    # TODO(synk): for B == 1 on v7x the reduction pass runs on one TensorCore; a
    # spatial split with a cross-core combine would engage both cores.
    if HW >= _WC:
        wc = _WC
        thw = min(avail // (4 * c_pad * itemsize), _MAX_THW, (HW // _WC) * _WC)
        if max_spatial_tile is not None:
            thw = min(thw, max_spatial_tile)
        thw = max(_WC, (thw // _WC) * _WC)
    else:
        thw = HW                                 # single full-width block
        wc = HW
    n_hw = pl.cdiv(HW, thw)
    needs_mask = (HW % thw) != 0

    # Pass 1: spatial-mean reduction + squeeze/excite -> sig (B, C, 1) in x dtype.
    sig = pl.pallas_call(
        functools.partial(_pool_excite_kernel, hw=HW, thw=thw, wc=wc,
                          inv_hw=inv_hw, needs_mask=needs_mask),
        out_shape=jax.ShapeDtypeStruct((B, C, 1), x.dtype),
        grid_spec=pltpu.PrefetchScalarGridSpec(
            num_scalar_prefetch=0,
            grid=(B, n_hw),
            in_specs=[
                pl.BlockSpec((None, C, thw), lambda b, k: (b, 0, k)),
                pl.BlockSpec((C2, C), lambda b, k: (0, 0)),
                pl.BlockSpec((C2, 1), lambda b, k: (0, 0)),
                pl.BlockSpec((C, C2), lambda b, k: (0, 0)),
                pl.BlockSpec((C, 1), lambda b, k: (0, 0)),
            ],
            out_specs=pl.BlockSpec((None, C, 1), lambda b, k: (b, 0, 0)),
            scratch_shapes=[pltpu.VMEM((C, wc), jnp.float32)],
        ),
        compiler_params=cparams(("parallel", "arbitrary")),
    )(x, w1f, b1c, w2f, b2c)

    # Pass 2: out = x * sig (pure elementwise; ragged edge blocks store-clipped).
    out = pl.pallas_call(
        _scale_kernel,
        out_shape=jax.ShapeDtypeStruct((B, C, HW), x.dtype),
        grid_spec=pltpu.PrefetchScalarGridSpec(
            num_scalar_prefetch=0,
            grid=(B, n_hw),
            in_specs=[
                pl.BlockSpec((None, C, thw), lambda b, k: (b, 0, k)),
                pl.BlockSpec((None, C, 1), lambda b, k: (b, 0, 0)),
            ],
            out_specs=pl.BlockSpec((None, C, thw), lambda b, k: (b, 0, k)),
        ),
        compiler_params=cparams(("parallel", "parallel")),
    )(x, sig)

    return out.reshape(B, C, H, W)


# ---------------------------------------------------------------------------
# Pure-JAX reference + self test
# ---------------------------------------------------------------------------
def _reference(x, w1, b1, w2, b2):
    xf = x.astype(jnp.float32)
    pooled = jnp.mean(xf, axis=(2, 3))                     # (B, C)
    h = pooled @ w1.astype(jnp.float32).T + b1
    h = h * jnp.clip(h + 3.0, 0.0, 6.0) / 6.0
    s = h @ w2.astype(jnp.float32).T + b2
    sig = jax.nn.sigmoid(s)
    return (xf * sig[:, :, None, None]).astype(x.dtype)


def _run_case(key, shape, **kwargs):
    B, C, H, W = shape
    C2 = C // 2
    kx, kw1, kb1, kw2, kb2 = jax.random.split(key, 5)
    x = jax.random.normal(kx, (B, C, H, W), dtype=jnp.float32)
    w1 = jax.random.normal(kw1, (C2, C), dtype=jnp.float32) * 0.5
    b1 = jax.random.normal(kb1, (C2,), dtype=jnp.float32) * 0.1
    w2 = jax.random.normal(kw2, (C, C2), dtype=jnp.float32) * 0.5
    b2 = jax.random.normal(kb2, (C,), dtype=jnp.float32) * 0.1

    out = jax.block_until_ready(se_module_forward(x, w1, b1, w2, b2, **kwargs))
    ref = _reference(x, w1, b1, w2, b2)
    assert out.shape == ref.shape
    assert jnp.allclose(out, ref, atol=2e-5, rtol=2e-5), (
        f"mismatch vs reference for shape {shape} kwargs={kwargs}")


if __name__ == "__main__":
    keys = jax.random.split(jax.random.PRNGKey(0), 4)
    # Fused single-pass path (HW a multiple of 128).
    _run_case(keys[0], (2, 4, 16, 16))
    # Fused path with a ragged (non-128-multiple) spatial extent.
    _run_case(keys[1], (3, 8, 10, 10))
    # Fused path with 512-aligned chunks plus a ragged tail.
    _run_case(keys[2], (2, 8, 24, 32))
    # Two-pass fallback: multi-step spatial reduction + masked edge block.
    _run_case(keys[3], (3, 8, 20, 32), force_two_pass=True, max_spatial_tile=512)
    print("KERNEL_OK")
</pallas_src>

<mosaic_0001>
module attributes {stable_mosaic.version = 11 : i64} {
  func.func @_fused_kernel(%arg0: i32, %arg1: memref<1x4x256xf32, #tpu.memory_space<vmem>>, %arg2: memref<2x4xf32, #tpu.memory_space<vmem>>, %arg3: memref<2x1xf32, #tpu.memory_space<vmem>>, %arg4: memref<4x2xf32, #tpu.memory_space<vmem>>, %arg5: memref<4x1xf32, #tpu.memory_space<vmem>>, %arg6: memref<1x4x256xf32, #tpu.memory_space<vmem>>) attributes {dimension_semantics = [#tpu.dimension_semantics<parallel>], iteration_bounds = array<i64: 2>, scalar_prefetch = 0 : i64, scratch_operands = 0 : i64, tpu.core_type = #tpu.core_type<tc>, window_params = [{transform_indices = @transform_0, window_bounds = array<i64: 1, 4, 256>}, {pipeline_mode = #tpu.pipeline_mode<synchronous>, transform_indices = @transform_1, window_bounds = array<i64: 2, 4>}, {pipeline_mode = #tpu.pipeline_mode<synchronous>, transform_indices = @transform_2, window_bounds = array<i64: 2, 1>}, {pipeline_mode = #tpu.pipeline_mode<synchronous>, transform_indices = @transform_3, window_bounds = array<i64: 4, 2>}, {pipeline_mode = #tpu.pipeline_mode<synchronous>, transform_indices = @transform_4, window_bounds = array<i64: 4, 1>}, {transform_indices = @transform_5, window_bounds = array<i64: 1, 4, 256>}]} {
    %cst = arith.constant 0.000000e+00 : f32
    %0 = vector.broadcast %cst : f32 to vector<4x1xf32>
    %c0 = arith.constant 0 : index
    %c0_0 = arith.constant 0 : index
    %c0_1 = arith.constant 0 : index
    %1 = vector.load %arg1[%c0, %c0_0, %c0_1] : memref<1x4x256xf32, #tpu.memory_space<vmem>>, vector<1x4x256xf32>
    %2 = vector.shape_cast %1 : vector<1x4x256xf32> to vector<4x256xf32>
    %cst_2 = arith.constant dense<0.000000e+00> : vector<4xf32>
    %3 = vector.multi_reduction <add>, %2, %cst_2 [1] : vector<4x256xf32> to vector<4xf32>
    %4 = vector.shape_cast %3 : vector<4xf32> to vector<4x1xf32>
    %5 = arith.addf %0, %4 : vector<4x1xf32>
    %cst_3 = arith.constant 3.906250e-03 : f32
    %6 = vector.broadcast %cst_3 : f32 to vector<4x1xf32>
    %7 = arith.mulf %5, %6 : vector<4x1xf32>
    %c0_4 = arith.constant 0 : index
    %c0_5 = arith.constant 0 : index
    %8 = vector.load %arg2[%c0_4, %c0_5] : memref<2x4xf32, #tpu.memory_space<vmem>>, vector<2x4xf32>
    %cst_6 = arith.constant dense<0.000000e+00> : vector<2x1xf32>
    %9 = tpu.matmul %8, %7, %cst_6 {dimension_numbers = #tpu.dot_dimension_numbers<[1], [0], [0], [1], [0, 0, 1, 1], [], []>} : vector<2x4xf32>, vector<4x1xf32>, vector<2x1xf32> -> vector<2x1xf32>
    %c0_7 = arith.constant 0 : index
    %c0_8 = arith.constant 0 : index
    %10 = vector.load %arg3[%c0_7, %c0_8] : memref<2x1xf32, #tpu.memory_space<vmem>>, vector<2x1xf32>
    %11 = arith.addf %9, %10 : vector<2x1xf32>
    %cst_9 = arith.constant 3.000000e+00 : f32
    %12 = vector.broadcast %cst_9 : f32 to vector<2x1xf32>
    %13 = arith.addf %11, %12 : vector<2x1xf32>
    %cst_10 = arith.constant 0.000000e+00 : f32
    %cst_11 = arith.constant 6.000000e+00 : f32
    %14 = vector.broadcast %cst_10 : f32 to vector<2x1xf32>
    %15 = arith.maximumf %14, %13 : vector<2x1xf32>
    %16 = vector.broadcast %cst_11 : f32 to vector<2x1xf32>
    %17 = arith.minimumf %16, %15 : vector<2x1xf32>
    %18 = arith.mulf %11, %17 : vector<2x1xf32>
    %cst_12 = arith.constant 0.166666672 : f32
    %19 = vector.broadcast %cst_12 : f32 to vector<2x1xf32>
    %20 = arith.mulf %18, %19 : vector<2x1xf32>
    %c0_13 = arith.constant 0 : index
    %c0_14 = arith.constant 0 : index
    %21 = vector.load %arg4[%c0_13, %c0_14] : memref<4x2xf32, #tpu.memory_space<vmem>>, vector<4x2xf32>
    %cst_15 = arith.constant dense<0.000000e+00> : vector<4x1xf32>
    %22 = tpu.matmul %21, %20, %cst_15 {dimension_numbers = #tpu.dot_dimension_numbers<[1], [0], [0], [1], [0, 0, 1, 1], [], []>} : vector<4x2xf32>, vector<2x1xf32>, vector<4x1xf32> -> vector<4x1xf32>
    %c0_16 = arith.constant 0 : index
    %c0_17 = arith.constant 0 : index
    %23 = vector.load %arg5[%c0_16, %c0_17] : memref<4x1xf32, #tpu.memory_space<vmem>>, vector<4x1xf32>
    %24 = arith.addf %22, %23 : vector<4x1xf32>
    %25 = arith.negf %24 : vector<4x1xf32>
    %26 = math.exp %25 : vector<4x1xf32>
    %cst_18 = arith.constant 1.000000e+00 : f32
    %27 = vector.broadcast %cst_18 : f32 to vector<4x1xf32>
    %28 = arith.addf %27, %26 : vector<4x1xf32>
    %29 = arith.divf %27, %28 : vector<4x1xf32>
    %c0_19 = arith.constant 0 : index
    %c0_20 = arith.constant 0 : index
    %c0_21 = arith.constant 0 : index
    %30 = vector.load %arg1[%c0_19, %c0_20, %c0_21] : memref<1x4x256xf32, #tpu.memory_space<vmem>>, vector<1x4x256xf32>
    %31 = vector.shape_cast %30 : vector<1x4x256xf32> to vector<4x256xf32>
    %32 = vector.broadcast %29 : vector<4x1xf32> to vector<4x256xf32>
    %33 = arith.mulf %31, %32 : vector<4x256xf32>
    %c0_22 = arith.constant 0 : index
    %c0_23 = arith.constant 0 : index
    %c0_24 = arith.constant 0 : index
    %34 = vector.load %arg6[%c0_22, %c0_23, %c0_24] : memref<1x4x256xf32, #tpu.memory_space<vmem>>, vector<1x4x256xf32>
    %35 = vector.shape_cast %34 : vector<1x4x256xf32> to vector<4x256xf32>
    %36 = vector.shape_cast %33 : vector<4x256xf32> to vector<1x4x256xf32>
    tpu.vector_store %arg6[%c0_22, %c0_23, %c0_24], %36 {strides = array<i32>} : memref<1x4x256xf32, #tpu.memory_space<vmem>>, vector<1x4x256xf32>,
    return
  }
  func.func @transform_0(%arg0: i32) -> (i32, i32, i32) {
    %c0_i32 = arith.constant 0 : i32
    %c0_i32_0 = arith.constant 0 : i32
    %c0_i32_1 = arith.constant 0 : i32
    return %arg0, %c0_i32, %c0_i32_0 : i32, i32, i32
  }
  func.func @transform_1(%arg0: i32) -> (i32, i32) {
    %c0_i32 = arith.constant 0 : i32
    %c0_i32_0 = arith.constant 0 : i32
    %c0_i32_1 = arith.constant 0 : i32
    return %c0_i32, %c0_i32_0 : i32, i32
  }
  func.func @transform_2(%arg0: i32) -> (i32, i32) {
    %c0_i32 = arith.constant 0 : i32
    %c0_i32_0 = arith.constant 0 : i32
    %c0_i32_1 = arith.constant 0 : i32
    return %c0_i32, %c0_i32_0 : i32, i32
  }
  func.func @transform_3(%arg0: i32) -> (i32, i32) {
    %c0_i32 = arith.constant 0 : i32
    %c0_i32_0 = arith.constant 0 : i32
    %c0_i32_1 = arith.constant 0 : i32
    return %c0_i32, %c0_i32_0 : i32, i32
  }
  func.func @transform_4(%arg0: i32) -> (i32, i32) {
    %c0_i32 = arith.constant 0 : i32
    %c0_i32_0 = arith.constant 0 : i32
    %c0_i32_1 = arith.constant 0 : i32
    return %c0_i32, %c0_i32_0 : i32, i32
  }
  func.func @transform_5(%arg0: i32) -> (i32, i32, i32) {
    %c0_i32 = arith.constant 0 : i32
    %c0_i32_0 = arith.constant 0 : i32
    %c0_i32_1 = arith.constant 0 : i32
    return %arg0, %c0_i32, %c0_i32_0 : i32, i32, i32
  }
}

</mosaic_0001>

<llo_original>
// kernel: tpu_custom_call.1
$region0: #{tpu_custom_call.1}
  #allocation0 [shape = 'u32[]', space=smem, size = 0x4, offset = 0x4, fixed_abs, tag = 'smem constant byte address 0x4 - core index']
  #allocation1 [shape = 'u32[72,128]{1,0:T(1,128)}', space=vmem, size = 0x9000, scoped, tag = 'internal scratch']
  %s0 = inlined_call_operand.hbm [shape: f32[2,4,256], index: 0, kind: input, shape index: {}]
  %s1 = inlined_call_operand.vmem [shape: f32[2,4], index: 1, kind: input, shape index: {}]
  %s2 = inlined_call_operand.vmem [shape: f32[2,1], index: 2, kind: input, shape index: {}]
  %s3 = inlined_call_operand.vmem [shape: f32[4,2], index: 3, kind: input, shape index: {}]
  %s4 = inlined_call_operand.vmem [shape: f32[4,1], index: 4, kind: input, shape index: {}]
  %s5 = inlined_call_operand.hbm [shape: f32[2,4,256], index: 5, kind: output, shape index: {}]
  %s6 = sld [smem:[#allocation0]]
  $region57: #{tpu_custom_call.1} parent=0
    _
  %s8 = ssub.s32 1, %s6
  %s9 = scalar_select 0, %s8, %s6
  $region1: #{tpu_custom_call.1} parent=0
    #allocation2 [shape = 'u8[8192]{0}', space=vmem, size = 0x2000, scoped, tag = 'input window, operand 0']
    #allocation3 [shape = 's32[2]{0}', space=sflag, size = 0x8, scoped, tag = 'scoped memory for tpu_custom_call.1']
    #allocation4 [shape = 's32[2]{0}', space=sflag, size = 0x8, scoped, tag = 'scoped memory for tpu_custom_call.1']
    #allocation5 [shape = 'u8[8192]{0}', space=vmem, size = 0x2000, scoped, tag = 'output window, operand 0']
    %10 = vsyncpa [#allocation3], 0
    %s11 = scalar_lea.sflag [#allocation3], 1
    %12 = vsyncpa %s11, 0
    %13 = vsyncpa [#allocation4], 0
    %s14 = scalar_lea.sflag [#allocation4], 1
    %15 = vsyncpa %s14, 0
    loop: start=0, step=1, limit=4
    $region2: #{tpu_custom_call.1} parent=1 // loop_pre_header
      _
    $region3: #{tpu_custom_call.1} parent=1 // loop_header
      %s17 = sphi 0, %s21
      %p18 = scmp.ge.s32.totalorder %s17, 4
      %s27 = sphi 0, %s29
      %s30 = sphi 0, %s27
      %s31 = sphi 0, %s30
      %s47 = sphi 0, %s31
      %s51 = sphi 0, %s51
      %s53 = sphi 0, %s51
      %s54 = sphi 0, %s53
      %s68 = sphi 0, %s54
      %s72 = sphi 0, %s72
      %s74 = sphi 0, %s72
      %s75 = sphi 0, %s74
      %s89 = sphi 0, %s75
      %s93 = sphi 0, %s93
      %s95 = sphi 0, %s93
      %s96 = sphi 0, %s95
      %s110 = sphi 0, %s96
      %s114 = sphi 0, %s114
      %s116 = sphi 0, %s114
      %s117 = sphi 0, %s116
      %s131 = sphi 0, %s117
      %s137 = sphi 0, %s139
      %s140 = sphi 0, %s137
      %s141 = sphi 0, %s140
      %s157 = sphi 0, %s141
    $region4: #{tpu_custom_call.1} parent=1 // loop_header_branch
      %20 = sbr.rel (%p18) target = $region8
    $region5: #{tpu_custom_call.1} parent=1 // loop_body
      %s22 = ssub.s32 %s17, 1
      %s23 = ssub.s32 %s17, 2
      %s24 = sadd.s32 %s17, 1
      %s25 = ssub.s32 %s17, %s24
      %p26 = scmp.eq.s32.totalorder %s25, 0
      %s28 = sadd.s32 %s27, 1
      %s29 = scalar_select %p26, %s27, %s28
      %p32 = pneg %p26
      %p33 = scmp.eq.s32.totalorder %s17, 1
      %p34 = por %p32, %p33
      %p35 = scmp.ne.s32.totalorder %s27, %s30
      %p36 = scmp.eq.s32.totalorder %s17, 0
      %p37 = por %p35, %p36
      %p38 = scmp.ne.s32.totalorder %s27, %s30
      %p39 = scmp.eq.s32.totalorder %s22, 1
      %p40 = por %p38, %p39
      %p41 = scmp.ne.s32.totalorder %s30, %s31
      %p42 = scmp.eq.s32.totalorder %s22, 0
      %p43 = por %p41, %p42
      %p44 = scmp.ne.s32.totalorder %s30, %s31
      %p45 = scmp.eq.s32.totalorder %s23, 1
      %p46 = por %p44, %p45
      %p48 = scmp.ne.s32.totalorder %s31, %s47
      %p49 = scmp.eq.s32.totalorder %s23, 0
      %p50 = por %p48, %p49
      %s52 = sadd.s32 %s51, 1
      %p55 = scmp.eq.s32.totalorder %s17, 1
      %p56 = scmp.ne.s32.totalorder %s51, %s53
      %p57 = scmp.eq.s32.totalorder %s17, 0
      %p58 = por %p56, %p57
      %p59 = scmp.ne.s32.totalorder %s51, %s53
      %p60 = scmp.eq.s32.totalorder %s22, 1
      %p61 = por %p59, %p60
      %p62 = scmp.ne.s32.totalorder %s53, %s54
      %p63 = scmp.eq.s32.totalorder %s22, 0
      %p64 = por %p62, %p63
      %p65 = scmp.ne.s32.totalorder %s53, %s54
      %p66 = scmp.eq.s32.totalorder %s23, 1
      %p67 = por %p65, %p66
      %p69 = scmp.ne.s32.totalorder %s54, %s68
      %p70 = scmp.eq.s32.totalorder %s23, 0
      %p71 = por %p69, %p70
      %s73 = sadd.s32 %s72, 1
      %p76 = scmp.eq.s32.totalorder %s17, 1
      %p77 = scmp.ne.s32.totalorder %s72, %s74
      %p78 = scmp.eq.s32.totalorder %s17, 0
      %p79 = por %p77, %p78
      %p80 = scmp.ne.s32.totalorder %s72, %s74
      %p81 = scmp.eq.s32.totalorder %s22, 1
      %p82 = por %p80, %p81
      %p83 = scmp.ne.s32.totalorder %s74, %s75
      %p84 = scmp.eq.s32.totalorder %s22, 0
      %p85 = por %p83, %p84
      %p86 = scmp.ne.s32.totalorder %s74, %s75
      %p87 = scmp.eq.s32.totalorder %s23, 1
      %p88 = por %p86, %p87
      %p90 = scmp.ne.s32.totalorder %s75, %s89
      %p91 = scmp.eq.s32.totalorder %s23, 0
      %p92 = por %p90, %p91
      %s94 = sadd.s32 %s93, 1
      %p97 = scmp.eq.s32.totalorder %s17, 1
      %p98 = scmp.ne.s32.totalorder %s93, %s95
      %p99 = scmp.eq.s32.totalorder %s17, 0
      %p100 = por %p98, %p99
      %p101 = scmp.ne.s32.totalorder %s93, %s95
      %p102 = scmp.eq.s32.totalorder %s22, 1
      %p103 = por %p101, %p102
      %p104 = scmp.ne.s32.totalorder %s95, %s96
      %p105 = scmp.eq.s32.totalorder %s22, 0
      %p106 = por %p104, %p105
      %p107 = scmp.ne.s32.totalorder %s95, %s96
      %p108 = scmp.eq.s32.totalorder %s23, 1
      %p109 = por %p107, %p108
      %p111 = scmp.ne.s32.totalorder %s96, %s110
      %p112 = scmp.eq.s32.totalorder %s23, 0
      %p113 = por %p111, %p112
      %s115 = sadd.s32 %s114, 1
      %p118 = scmp.eq.s32.totalorder %s17, 1
      %p119 = scmp.ne.s32.totalorder %s114, %s116
      %p120 = scmp.eq.s32.totalorder %s17, 0
      %p121 = por %p119, %p120
      %p122 = scmp.ne.s32.totalorder %s114, %s116
      %p123 = scmp.eq.s32.totalorder %s22, 1
      %p124 = por %p122, %p123
      %p125 = scmp.ne.s32.totalorder %s116, %s117
      %p126 = scmp.eq.s32.totalorder %s22, 0
      %p127 = por %p125, %p126
      %p128 = scmp.ne.s32.totalorder %s116, %s117
      %p129 = scmp.eq.s32.totalorder %s23, 1
      %p130 = por %p128, %p129
      %p132 = scmp.ne.s32.totalorder %s117, %s131
      %p133 = scmp.eq.s32.totalorder %s23, 0
      %p134 = por %p132, %p133
      %s135 = ssub.s32 %s17, %s24
      %p136 = scmp.eq.s32.totalorder %s135, 0
      %s138 = sadd.s32 %s137, 1
      %s139 = scalar_select %p136, %s137, %s138
      %p142 = pneg %p136
      %p143 = scmp.eq.s32.totalorder %s17, 1
      %p144 = por %p142, %p143
      %p145 = scmp.ne.s32.totalorder %s137, %s140
      %p146 = scmp.eq.s32.totalorder %s17, 0
      %p147 = por %p145, %p146
      %p148 = scmp.ne.s32.totalorder %s137, %s140
      %p149 = scmp.eq.s32.totalorder %s22, 1
      %p150 = por %p148, %p149
      %p151 = scmp.ne.s32.totalorder %s140, %s141
      %p152 = scmp.eq.s32.totalorder %s22, 0
      %p153 = por %p151, %p152
      %p154 = scmp.ne.s32.totalorder %s140, %s141
      %p155 = scmp.eq.s32.totalorder %s23, 1
      %p156 = por %p154, %p155
      %p158 = scmp.ne.s32.totalorder %s141, %s157
      %p159 = scmp.eq.s32.totalorder %s23, 0
      %p160 = por %p158, %p159
      %p161 = scmp.le.s32.totalorder 1, %s17
      %p162 = scmp.lt.s32.totalorder %s17, 3
      %p163 = pnand %p161, %p162
      %p164 = pneg %p163
      // Predicated region
      $region9: #{tpu_custom_call.1} parent=5 // pred_check
        _
      $region10: #{tpu_custom_call.1} parent=5 // pred_check_branch
        %166 = sbr.rel (%p163) target = $region12
      $region11: #{tpu_custom_call.1} parent=5 // pred_region
        %s167 = ssub.s32 %s17, 1
        // Predicated region
        $region13: #{tpu_custom_call.1} parent=11 // pred_check
          %p168 = pneg %p64
        $region14: #{tpu_custom_call.1} parent=11 // pred_check_branch
          %170 = sbr.rel (%p168) target = $region16
        $region15: #{tpu_custom_call.1} parent=11 // pred_region
          _
        $region16: #{tpu_custom_call.1} parent=11 // pred_fallthru
          _
        // Predicated region
        $region17: #{tpu_custom_call.1} parent=11 // pred_check
          %p171 = pneg %p85
        $region18: #{tpu_custom_call.1} parent=11 // pred_check_branch
          %173 = sbr.rel (%p171) target = $region20
        $region19: #{tpu_custom_call.1} parent=11 // pred_region
          _
        $region20: #{tpu_custom_call.1} parent=11 // pred_fallthru
          _
        // Predicated region
        $region21: #{tpu_custom_call.1} parent=11 // pred_check
          %p174 = pneg %p106
        $region22: #{tpu_custom_call.1} parent=11 // pred_check_branch
          %176 = sbr.rel (%p174) target = $region24
        $region23: #{tpu_custom_call.1} parent=11 // pred_region
          _
        $region24: #{tpu_custom_call.1} parent=11 // pred_fallthru
          _
        // Predicated region
        $region25: #{tpu_custom_call.1} parent=11 // pred_check
          %p177 = pneg %p127
        $region26: #{tpu_custom_call.1} parent=11 // pred_check_branch
          %179 = sbr.rel (%p177) target = $region28
        $region27: #{tpu_custom_call.1} parent=11 // pred_region
          _
        $region28: #{tpu_custom_call.1} parent=11 // pred_fallthru
          _
      $region12: #{tpu_custom_call.1} parent=5 // pred_fallthru
        _
      %p180 = scmp.lt.s32.totalorder %s17, 2
      // Predicated region
      $region29: #{tpu_custom_call.1} parent=5 // pred_check
        %p181 = pneg %p180
      $region30: #{tpu_custom_call.1} parent=5 // pred_check_branch
        %183 = sbr.rel (%p181) target = $region32
      $region31: #{tpu_custom_call.1} parent=5 // pred_region
        // Predicated region
        $region33: #{tpu_custom_call.1} parent=31 // pred_check
          %p184 = pneg %p37
        $region34: #{tpu_custom_call.1} parent=31 // pred_check_branch
          %186 = sbr.rel (%p184) target = $region36
        $region35: #{tpu_custom_call.1} parent=31 // pred_region
          %s187 = sand.u32 %s27, 1
          %s188 = scalar_lea.sflag [#allocation3], %s187
          %s189 = sand.u32 %s27, 1
          %s190 = smul.addr %s189, 8
          %s191 = scalar_lea.vmem [#allocation2], %s190
          %193 = vsyncadd %s188, 0
          %s194 = smul.addr %s17, 2
          %s195 = smul.addr %s194, 4
          %s196 = scalar_lea.hbm %s0, %s195
          %s198 = sshll.u32 %s196, 4
          %s199 = int_to_ptr.hbm [resolvable:$true] %s198
          %s200 = sshll.u32 %s191, 4
          %s201 = int_to_ptr.vmem [resolvable:$true] %s200
          %203 = dma.hbm_to_vmem [thread:$0]  %s199, 128, %s201, %s188
        $region36: #{tpu_custom_call.1} parent=31 // pred_fallthru
          _
      $region32: #{tpu_custom_call.1} parent=5 // pred_fallthru
        _
      %p204 = scmp.le.s32.totalorder 1, %s17
      %p205 = scmp.lt.s32.totalorder %s17, 3
      %p206 = pnand %p204, %p205
      %p207 = pneg %p206
      // Predicated region
      $region37: #{tpu_custom_call.1} parent=5 // pred_check
        _
      $region38: #{tpu_custom_call.1} parent=5 // pred_check_branch
        %209 = sbr.rel (%p206) target = $region40
      $region39: #{tpu_custom_call.1} parent=5 // pred_region
        %s210 = ssub.s32 %s17, 1
        %s211 = sand.u32 %s30, 1
        %s212 = scalar_lea.sflag [#allocation3], %s211
        %s213 = sand.u32 %s30, 1
        %s214 = smul.addr %s213, 8
        %s215 = scalar_lea.vmem [#allocation2], %s214
        // Predicated region
        $region41: #{tpu_custom_call.1} parent=39 // pred_check
          %p216 = pneg %p43
        $region42: #{tpu_custom_call.1} parent=39 // pred_check_branch
          %218 = sbr.rel (%p216) target = $region44
        $region43: #{tpu_custom_call.1} parent=39 // pred_region
          %220 = dma.done %s212, 128
        $region44: #{tpu_custom_call.1} parent=39 // pred_fallthru
          _
        %s221 = sand.u32 %s30, 1
        %s222 = scalar_lea.sflag [#allocation3], %s221
        %s223 = sand.u32 %s30, 1
        %s224 = smul.addr %s223, 8
        %s225 = scalar_lea.vmem [#allocation2], %s224
        %p226 = pneg %p43
        %p227 = pneg %p40
        %p228 = pneg %p64
        %p229 = pneg %p61
        %p230 = pneg %p85
        %p231 = pneg %p82
        %p232 = pneg %p106
        %p233 = pneg %p103
        %p234 = pneg %p127
        %p235 = pneg %p124
        %p236 = pneg %p153
        %p237 = pneg %p150
        %s238 = sand.u32 %s140, 1
        %s239 = scalar_lea.sflag [#allocation4], %s238
        %s240 = sand.u32 %s140, 1
        %s241 = smul.addr %s240, 8
        %s242 = scalar_lea.vmem [#allocation5], %s241
        %v243 = vld [vmem:[%s215] sm:$0xff]
        %245 = vst [vmem:[#allocation1] ss:$2 sm:$0xff] %v243
        %v246 = vld.sshfl [vmem:[#allocation1] sm:$0xff pattern:$0x75316420]
        %v247 = vld.sshfl [vmem:[#allocation1 + $0x8] sm:$0xff pattern:$0x75316420]
        %vm250 = vcmask 1043456
        %v251 = vsel %vm250, %v246, 0.0
        %v252 = vsel %vm250, %v247, 0.0
        %v253 = vadd.f32 %v251, %v252
        %254 = vadd.xlane.f32.xlu0 %v253
        %v255 = vpop.xlane.xlu0 %254
        %v256 = vadd.f32 %v255, 0.0
        %v257 = vmul.f32 %v256, 0.00390625
        %v258 = vld [vmem:[%s1] sm:$0x3]
        %v259 = vld [vmem:[%s2] sm:$0x3]
        %vm260 = vcmask 31744
        %v262 = vsel %vm260, %v258, 0
        %v265 = vsel %vm250, %v257, 0
        %267 = vmatpush.msra.mxu0 0.0
        %268 = vmatpush.msra.mxu0 0.0
        %269 = vmatpush.msra.mxu0 0.0
        %270 = vmatpush.msra.mxu0 0.0
        %271 = vmatpush.msra.mxu0 0.0
        %272 = vmatpush.msra.mxu0 0.0
        %273 = vmatpush.msra.mxu0 0.0
        %274 = vmatpush.msra.mxu0 0.0
        %275 = vmatpush.msra.mxu0 0.0
        %276 = vmatpush.msra.mxu0 0.0
        %277 = vmatpush.msra.mxu0 0.0
        %278 = vmatpush.msra.mxu0 0.0
        %279 = vmatpush.msra.mxu0 0.0
        %280 = vmatpush.msra.mxu0 0.0
        %281 = vmatpush.msra.mxu0 0.0
        %282 = vmatpush.msra.mxu0 %v265
        %283 = vmatmul.f32.gmra.mxu0 %v262
        %v284 = vpop.f32.mrf.mxu0
        %v285 = vadd.f32 %v259, %v284
        %286 = vdwg.mxu0
        %v287 = vadd.f32 %v285, 3.0
        %v288 = vmax.f32 %v287, 0.0
        %v289 = vmin.f32 %v288, 6.0
        %v290 = vmul.f32 %v285, %v289
        %v291 = vmul.f32 %v290, 0.16666667
        %v292 = vld [vmem:[%s3] sm:$0xf]
        %v293 = vld [vmem:[%s4] sm:$0xf]
        %vm294 = vcmask 15360
        %v296 = vsel %vm294, %v292, 0
        %vm298 = vcmask 1041408
        %v300 = vsel %vm298, %v291, 0
        %302 = vmatpush.msra.mxu0 0.0
        %303 = vmatpush.msra.mxu0 0.0
        %304 = vmatpush.msra.mxu0 0.0
        %305 = vmatpush.msra.mxu0 0.0
        %306 = vmatpush.msra.mxu0 0.0
        %307 = vmatpush.msra.mxu0 0.0
        %308 = vmatpush.msra.mxu0 0.0
        %309 = vmatpush.msra.mxu0 0.0
        %310 = vmatpush.msra.mxu0 0.0
        %311 = vmatpush.msra.mxu0 0.0
        %312 = vmatpush.msra.mxu0 0.0
        %313 = vmatpush.msra.mxu0 0.0
        %314 = vmatpush.msra.mxu0 0.0
        %315 = vmatpush.msra.mxu0 0.0
        %316 = vmatpush.msra.mxu0 0.0
        %317 = vmatpush.msra.mxu0 %v300
        %318 = vmatmul.f32.gmra.mxu0 %v296
        %v319 = vpop.f32.mrf.mxu0
        %v320 = vadd.f32 %v293, %v319
        %321 = vdwg.mxu0
        %v322 = vxor.u32 %v320, 2147483648
        %v323 = vmul.f32 %v322, 1.442695
        %v324 = vpow.pop %v323
        %v325 = vadd.f32 %v324, 1.0
        %v326 = vrcp.pop %v325
        %v327 = vmul.f32 %v325, %v326
        %v328 = vsub.f32 1.0, %v327
        %v329 = vmul.f32 %v326, %v328
        %v330 = vadd.f32 %v326, %v329
        %vm331 = vweird.f32 %v325
        %vm332 = vweird.f32 %v326
        %vm333 = vmor %vm331, %vm332
        %v334 = vsel %vm333, %v326, %v330
        %v335 = vand.u32 2147483647, %v325
        %vm336 = vcmp.eq.f32.partialorder %v335, 8.507059e+37
        %v337 = vand.u32 %v325, 2147483648
        %v338 = vor.u32 1.1754944e-38, %v337
        %v339 = vsel %vm336, %v338, %v334
        %v340 = vmul.f32 1.0, %v339
        %342 = vset.pattern.permute.xlu0 0
        %343 = vperm.xlu0 %342, %v340
        %v344 = vpop.permute.xlu0 %343
        %v346 = vunpack.c.l.s4 839922192
        %v347 = vunpack.c.0.s8 %v346
        %v348 = vperm.slane %v344, %v347
        %v350 = vmul.f32 %v243, %v348
        %351 = vst [vmem:[%s242] sm:$0xff] %v350
        %s352 = sand.u32 %s140, 1
        %s353 = scalar_lea.sflag [#allocation4], %s352
        %s354 = sand.u32 %s140, 1
        %s355 = smul.addr %s354, 8
        %s356 = scalar_lea.vmem [#allocation5], %s355
        // Predicated region
        $region45: #{tpu_custom_call.1} parent=39 // pred_check
          %p357 = pneg %p150
        $region46: #{tpu_custom_call.1} parent=39 // pred_check_branch
          %359 = sbr.rel (%p357) target = $region48
        $region47: #{tpu_custom_call.1} parent=39 // pred_region
          %361 = vsyncadd %s353, 0
          %s362 = smul.addr %s22, 2
          %s363 = smul.addr %s362, 4
          %s364 = scalar_lea.hbm %s5, %s363
          %s366 = sshll.u32 %s356, 4
          %s367 = int_to_ptr.vmem [resolvable:$true] %s366
          %s368 = sshll.u32 %s364, 4
          %s369 = int_to_ptr.hbm [resolvable:$true] %s368
          %371 = dma.vmem_to_hbm [thread:$0]  %s367, 128, %s369, %s353
        $region48: #{tpu_custom_call.1} parent=39 // pred_fallthru
          _
      $region40: #{tpu_custom_call.1} parent=5 // pred_fallthru
        _
      %p372 = scmp.le.s32.totalorder 2, %s17
      // Predicated region
      $region49: #{tpu_custom_call.1} parent=5 // pred_check
        %p373 = pneg %p372
      $region50: #{tpu_custom_call.1} parent=5 // pred_check_branch
        %375 = sbr.rel (%p373) target = $region52
      $region51: #{tpu_custom_call.1} parent=5 // pred_region
        %s376 = ssub.s32 %s17, 2
        // Predicated region
        $region53: #{tpu_custom_call.1} parent=51 // pred_check
          %p377 = pneg %p156
        $region54: #{tpu_custom_call.1} parent=51 // pred_check_branch
          %379 = sbr.rel (%p377) target = $region56
        $region55: #{tpu_custom_call.1} parent=51 // pred_region
          %s380 = sand.u32 %s141, 1
          %s381 = scalar_lea.sflag [#allocation4], %s380
          %s382 = sand.u32 %s141, 1
          %s383 = smul.addr %s382, 8
          %s384 = scalar_lea.vmem [#allocation5], %s383
          %386 = dma.done %s381, 128
        $region56: #{tpu_custom_call.1} parent=51 // pred_fallthru
          _
      $region52: #{tpu_custom_call.1} parent=5 // pred_fallthru
        _
    $region6: #{tpu_custom_call.1} parent=1 // loop_footer
      %s21 = sadd.s32 1, %s17
    $region7: #{tpu_custom_call.1} parent=1 // loop_footer_branch
      %16 = sbr.rel target = $region3
    $region8: #{tpu_custom_call.1} parent=1 // loop_exit
      _
    %387 = vsyncpa [#allocation3], 1
    %s388 = scalar_lea.sflag [#allocation3], 1
    %389 = vsyncpa %s388, 1
    %390 = vsyncpa [#allocation4], 1
    %s391 = scalar_lea.sflag [#allocation4], 1
    %392 = vsyncpa %s391, 1

</llo_original>
